<compile_context>
chip_gen: v5e
topology: v5e:2x2
jax: 0.10.0
libtpu: 0.0.40
codegen_flags: <defaults>
</compile_context>

<pallas_src>
import jax
import jax.numpy as jnp
from jax import lax
from jax.experimental import pallas as pl
from jax.experimental.pallas import tpu as pltpu

NEG_SLOPE = 0.01        # F.leaky_relu default negative_slope
BN_EPS = 1e-5
LANE = 128


def _round_up(n, m):
    return ((n + m - 1) // m) * m


def _leaky(h):
    return jnp.where(h > 0, h, NEG_SLOPE * h)


def _vmem_budget():
    """Usable per-core VMEM budget (bytes), leaving compiler headroom.

    v5e/v6e: 128 MiB physical -> ~112 MiB usable.  v7x: 64 MiB -> ~56 MiB.
    """
    cap = 0
    try:
        info = pltpu.get_tpu_info()
        cap = int(getattr(info, "vmem_capacity_bytes", 0))
    except Exception:
        cap = 0
    if cap <= 0:
        try:
            kind = jax.devices()[0].device_kind.lower()
            cap = (128 << 20) if ("v5" in kind or "v6" in kind) else (64 << 20)
        except Exception:
            cap = 64 << 20          # conservative (v7x per-TC VMEM)
    return cap - max(cap // 8, 8 << 20)


def _spec(shape, index_map, buffers=None):
    """BlockSpec with optional pipeline_mode=pl.Buffered(n) (graceful fallback)."""
    if buffers is not None:
        try:
            return pl.BlockSpec(shape, index_map, pipeline_mode=pl.Buffered(buffers))
        except Exception:
            pass
    return pl.BlockSpec(shape, index_map)


def _pick_tm(n_pad):
    for cand in (512, 256, 128):
        if n_pad % cand == 0:
            return cand
    return 128


# ----------------------------------------------------------------------------
# Kernel 1: all 5 GCN layers fused.
#   grid = (L, num_row_tiles)  (layer axis outer, A row-tile axis inner)
#   per step: h_tile = BN_affine( leaky_relu( A_tile @ (X @ W_l) + b_l ) )
#   The resident output block (constant block index, bf16) doubles as the
#   inter-layer activation buffer, so activations never touch HBM and the
#   output is written back exactly once after the last layer.
# ----------------------------------------------------------------------------
def _make_gcn_kernel(a_resident, tm):
    def kernel(a_ref, xw0_ref, w_ref, b_ref, scale_ref, shift_ref, o_ref, xw_ref):
        l = pl.program_id(0)
        i = pl.program_id(1)

        # X @ W_l for the whole layer, once per layer at the first row tile
        # (before any row of o_ref is overwritten by this layer's output).
        # Layer 0 uses the XLA-precomputed x0 @ W0 -> no in-kernel bubble and
        # the padded input never has to stay resident in VMEM.
        @pl.when(i == 0)
        def _():
            @pl.when(l == 0)
            def _():
                xw_ref[...] = xw0_ref[...]

            @pl.when(l > 0)
            def _():
                xw_ref[...] = jnp.dot(
                    o_ref[...], w_ref[...],
                    preferred_element_type=jnp.float32).astype(jnp.bfloat16)

        row0 = pl.multiple_of(i * tm, tm)
        a_tile = a_ref[pl.ds(row0, tm), :] if a_resident else a_ref[...]

        # Aggregation on the MXU: bf16 operands, f32 accumulation.
        h = jnp.dot(a_tile, xw_ref[...],
                    preferred_element_type=jnp.float32) + b_ref[...]
        h = _leaky(h)                             # F.leaky_relu(conv(x))
        h = h * scale_ref[...] + shift_ref[...]   # eval-mode BatchNorm (affine)
        # Dropout in eval mode is identity -> nothing to do.

        # o_ref is resident (constant block index) across the whole grid:
        # it stores layer l's activations for layer l+1's X@W and is flushed
        # to HBM once, after the final grid step.
        o_ref[pl.ds(row0, tm), :] = h.astype(jnp.bfloat16)

    return kernel


def fused_gcn(A_bf16, xw0_bf16, W, b, scale, shift):
    N_pad = A_bf16.shape[0]
    L, Fmax, _ = W.shape

    budget = _vmem_budget()

    # VMEM footprint that does not depend on how A is staged.
    fixed = (1 * N_pad * Fmax * 2        # xw0 (resident, single-buffered)
             + 2 * N_pad * Fmax * 2      # bf16 output block (resident; 2 bufs worst case)
             + 1 * N_pad * Fmax * 2      # X@W scratch
             + 2 * Fmax * Fmax * 2       # W_l (double-buffered)
             + 2 * 3 * Fmax * 4)         # b / scale / shift

    tm = _pick_tm(N_pad)
    a_resident = (fixed + N_pad * N_pad * 2) <= budget

    if a_resident:
        # A fetched from HBM exactly once and kept resident (single buffer).
        a_spec = _spec((N_pad, N_pad), lambda l, i: (0, 0), buffers=1)
        a_vmem = N_pad * N_pad * 2
        a_hbm = N_pad * N_pad * 2
    else:
        # Streamed row tiles of A, re-fetched every layer; deeper pipeline to
        # hide the per-layer X@W bubble behind the A DMAs when budget allows.
        n_buf = 3 if (fixed + 3 * tm * N_pad * 2) <= budget else 2
        while tm > 128 and (fixed + n_buf * tm * N_pad * 2) > budget:
            tm //= 2
        a_spec = _spec((tm, N_pad), lambda l, i: (i, 0), buffers=n_buf)
        a_vmem = n_buf * tm * N_pad * 2
        a_hbm = L * N_pad * N_pad * 2
    nt = N_pad // tm

    flops = L * (2 * N_pad * Fmax * Fmax + 2 * N_pad * N_pad * Fmax)
    bytes_accessed = (a_hbm
                      + L * Fmax * Fmax * 2          # weights (bf16)
                      + N_pad * Fmax * 2             # xw0 in (bf16)
                      + N_pad * Fmax * 2             # output (bf16, single writeback)
                      + 3 * L * Fmax * 4)            # b / scale / shift
    vmem_limit = int(min(budget, max(fixed + a_vmem + (8 << 20), 32 << 20)))

    # TODO(synk): v7x-only fp8 (e4m3) storage for A and a core_map split of the
    #             row-tile axis across the 2 TensorCores are further wins not
    #             taken here (accuracy check / shared-activation plumbing).
    return pl.pallas_call(
        _make_gcn_kernel(a_resident, tm),
        out_shape=jax.ShapeDtypeStruct((N_pad, Fmax), jnp.bfloat16),
        grid_spec=pltpu.PrefetchScalarGridSpec(
            num_scalar_prefetch=0,
            grid=(L, nt),
            in_specs=[
                a_spec,                                                     # A
                _spec((N_pad, Fmax), lambda l, i: (0, 0), buffers=1),       # x0 @ W0
                pl.BlockSpec((None, Fmax, Fmax), lambda l, i: (l, 0, 0)),   # W_l
                pl.BlockSpec((None, 1, Fmax), lambda l, i: (l, 0, 0)),      # b_l
                pl.BlockSpec((None, 1, Fmax), lambda l, i: (l, 0, 0)),      # scale_l
                pl.BlockSpec((None, 1, Fmax), lambda l, i: (l, 0, 0)),      # shift_l
            ],
            out_specs=pl.BlockSpec((N_pad, Fmax), lambda l, i: (0, 0)),     # resident
            scratch_shapes=[pltpu.VMEM((N_pad, Fmax), jnp.bfloat16)],       # X @ W_l
        ),
        # Row-tile axis cannot be 'parallel': all tiles of layer l feed layer
        # l+1 through the resident output/activation block, so both axes are
        # sequential on one TensorCore.
        compiler_params=pltpu.CompilerParams(
            dimension_semantics=("arbitrary", "arbitrary"),
            vmem_limit_bytes=vmem_limit),
        cost_estimate=pl.CostEstimate(flops=int(flops), transcendentals=0,
                                      bytes_accessed=int(bytes_accessed)),
    )(A_bf16, xw0_bf16, W, b, scale, shift)


# ----------------------------------------------------------------------------
# Kernel 2: GlobalAttention pooling (segment softmax) + 3-layer MLP head.
#   x     : (N_pad, F)  bf16 node features (output of kernel 1)
#   mt    : (N_pad, B)  bf16 graph-membership matrix (transposed one-hot)
#   valid : (N_pad, 1)  f32, 1.0 for real nodes, 0.0 for padding rows
# TODO(synk): for very large N, stream x / mt in node blocks with an online
#             segment softmax; whole-resident is fine at molecular-graph sizes.
# ----------------------------------------------------------------------------
def pool_mlp_kernel(x_ref, mt_ref, valid_ref, gw_ref, gb_ref,
                    w1_ref, b1_ref, w2_ref, b2_ref, w3_ref, b3_ref, o_ref):
    x = x_ref[...]                      # (N, F) bf16
    mt = mt_ref[...]                    # (N, B) bf16 (exact 0/1 values)
    valid = valid_ref[...]              # (N, 1) f32
    mtf = mt.astype(jnp.float32)

    # gate scores: Linear(4H, 1)  (bf16 operands, f32 accumulation)
    gate = jnp.dot(x, gw_ref[...],
                   preferred_element_type=jnp.float32) + gb_ref[...]   # (N, 1)
    gate = jnp.where(valid > 0, gate, jnp.float32(-1e30))              # mask pad rows

    # per-graph softmax over nodes (numerically stable, f32 throughout)
    masked = jnp.where(mtf > 0, gate, jnp.float32(-1e30))        # (N, B)
    seg_max = jnp.max(masked, axis=0, keepdims=True)              # (1, B)
    node_max = jnp.sum(mtf * seg_max, axis=1, keepdims=True)      # (N, 1)
    e = jnp.exp(gate - node_max)                                  # (N, 1)
    seg_sum = jnp.sum(mtf * e, axis=0, keepdims=True)             # (1, B)
    node_sum = jnp.sum(mtf * seg_sum, axis=1, keepdims=True)      # (N, 1)
    node_sum = jnp.where(node_sum > 0, node_sum, jnp.float32(1.0))  # pad-row guard
    alpha = e / node_sum                                          # (N, 1)

    # pooled[b, f] = sum_n mt[n, b] * alpha[n] * x[n, f] — bf16 MXU contraction.
    wx = (alpha * x.astype(jnp.float32)).astype(jnp.bfloat16)     # (N, F)
    pooled = lax.dot_general(mt, wx,
                             dimension_numbers=(((0,), (0,)), ((), ())),
                             preferred_element_type=jnp.float32)  # (B, F) f32

    h = _leaky(jnp.dot(pooled.astype(jnp.bfloat16), w1_ref[...],
                       preferred_element_type=jnp.float32) + b1_ref[...])
    h = _leaky(jnp.dot(h.astype(jnp.bfloat16), w2_ref[...],
                       preferred_element_type=jnp.float32) + b2_ref[...])
    o_ref[...] = jnp.dot(h.astype(jnp.bfloat16), w3_ref[...],
                         preferred_element_type=jnp.float32) + b3_ref[...]


def pool_mlp(x, mt, valid, gate_w, gate_b, fc1_w, fc1_b, fc2_w, fc2_b, fc3_w, fc3_b):
    N_pad, F = x.shape
    B = mt.shape[1]
    h2 = fc1_w.shape[1]
    h1 = fc2_w.shape[1]

    flops = (2 * N_pad * F + 2 * N_pad * B * F
             + 2 * B * (F * h2 + h2 * h1 + h1))
    bytes_accessed = (x.size * 2 + mt.size * 2 + valid.size * 4
                      + (gate_w.size + fc1_w.size + fc2_w.size + fc3_w.size) * 2
                      + (gate_b.size + fc1_b.size + fc2_b.size + fc3_b.size) * 4
                      + B * 4)
    budget = _vmem_budget()
    vmem_limit = int(min(budget, max(4 * bytes_accessed + (8 << 20), 32 << 20)))

    return pl.pallas_call(
        pool_mlp_kernel,
        out_shape=jax.ShapeDtypeStruct((B, 1), jnp.float32),
        in_specs=[pl.BlockSpec(memory_space=pltpu.MemorySpace.VMEM)] * 11,
        out_specs=pl.BlockSpec(memory_space=pltpu.MemorySpace.VMEM),
        compiler_params=pltpu.CompilerParams(vmem_limit_bytes=vmem_limit),
        cost_estimate=pl.CostEstimate(flops=int(flops),
                                      transcendentals=int(N_pad),
                                      bytes_accessed=int(bytes_accessed)),
    )(x, mt, valid, gate_w, gate_b, fc1_w, fc1_b, fc2_w, fc2_b, fc3_w, fc3_b)


# ----------------------------------------------------------------------------
# Plain-JAX glue: dense GCN-normalized adjacency (with self loops), params.
# ----------------------------------------------------------------------------
def build_norm_adj(edge_index, edge_weight, num_nodes):
    row, col = edge_index[0], edge_index[1]           # source, target
    loop = jnp.arange(num_nodes, dtype=edge_index.dtype)
    row = jnp.concatenate([row, loop])
    col = jnp.concatenate([col, loop])
    ew = jnp.concatenate([edge_weight.astype(jnp.float32),
                          jnp.ones((num_nodes,), jnp.float32)])
    deg = jnp.zeros((num_nodes,), jnp.float32).at[col].add(ew)
    dinv = jnp.where(deg > 0, 1.0 / jnp.sqrt(deg), 0.0)
    norm = dinv[row] * ew * dinv[col]
    # out[i] = sum_{(j -> i)} norm * x[j]   =>   A[i, j] += norm
    A = jnp.zeros((num_nodes, num_nodes), jnp.float32).at[col, row].add(norm)
    return A
# TODO(synk): for graphs with thousands of nodes, replace the dense O(N^2)
#             adjacency with a block-sparse / gather formulation, and pack
#             many graphs block-diagonally per call so N_pad >= ~1024 before
#             invoking the fused kernel (amortizes per-step overhead).


def init_params(key, in_dim, hidden, edge_dim):
    del edge_dim  # see TODO(synk) above: scalar edge weights are used
    dims = [in_dim, 4 * hidden, 2 * hidden, hidden, 2 * hidden, 4 * hidden]
    L = len(dims) - 1
    # TODO(synk): per-layer widths vary 4x; a common Fmax pad wastes MXU FLOPs
    #             for large hidden — per-layer exact multiple-of-128 widths
    #             (or a scalar-prefetched column-tile axis) would remove it.
    Fmax = _round_up(max(dims), LANE)          # common padded feature width
    keys = iter(jax.random.split(key, 4 * L + 16))

    # Stacked, zero-padded per-layer parameters (lane-dense, one pallas_call).
    W = jnp.zeros((L, Fmax, Fmax), jnp.float32)
    b = jnp.zeros((L, 1, Fmax), jnp.float32)
    scale = jnp.ones((L, 1, Fmax), jnp.float32)
    shift = jnp.zeros((L, 1, Fmax), jnp.float32)
    for li, (fin, fout) in enumerate(zip(dims[:-1], dims[1:])):
        Wl = jax.random.normal(next(keys), (fin, fout), jnp.float32) / jnp.sqrt(fin)
        bl = 0.01 * jax.random.normal(next(keys), (fout,), jnp.float32)
        gamma = 1.0 + 0.1 * jax.random.normal(next(keys), (fout,), jnp.float32)
        beta = 0.1 * jax.random.normal(next(keys), (fout,), jnp.float32)
        running_mean = jnp.zeros((fout,), jnp.float32)
        running_var = jnp.ones((fout,), jnp.float32)
        sc = gamma / jnp.sqrt(running_var + BN_EPS)     # eval-mode BN folded
        sh = beta - running_mean * sc
        W = W.at[li, :fin, :fout].set(Wl)
        b = b.at[li, 0, :fout].set(bl)
        scale = scale.at[li, 0, :fout].set(sc)
        shift = shift.at[li, 0, :fout].set(sh)

    f4, f2, f1 = 4 * hidden, 2 * hidden, hidden
    f2p, f1p = _round_up(f2, LANE), _round_up(f1, LANE)

    def pad2(a, r, c):
        return jnp.zeros((r, c), jnp.float32).at[:a.shape[0], :a.shape[1]].set(a)

    gate_w = pad2(jax.random.normal(next(keys), (f4, 1), jnp.float32) / jnp.sqrt(f4), Fmax, 1)
    fc1_w = pad2(jax.random.normal(next(keys), (f4, f2), jnp.float32) / jnp.sqrt(f4), Fmax, f2p)
    fc2_w = pad2(jax.random.normal(next(keys), (f2, f1), jnp.float32) / jnp.sqrt(f2), f2p, f1p)
    fc3_w = pad2(jax.random.normal(next(keys), (f1, 1), jnp.float32) / jnp.sqrt(f1), f1p, 1)

    fc1_b = jnp.zeros((1, f2p), jnp.float32).at[0, :f2].set(
        0.01 * jax.random.normal(next(keys), (f2,), jnp.float32))
    fc2_b = jnp.zeros((1, f1p), jnp.float32).at[0, :f1].set(
        0.01 * jax.random.normal(next(keys), (f1,), jnp.float32))
    fc3_b = 0.01 * jax.random.normal(next(keys), (1, 1), jnp.float32)
    gate_b = jnp.zeros((1, 1), jnp.float32)

    return dict(
        Fmax=Fmax,
        W=W.astype(jnp.bfloat16), b=b, scale=scale, shift=shift,
        gate_w=gate_w.astype(jnp.bfloat16), gate_b=gate_b,
        fc1_w=fc1_w.astype(jnp.bfloat16), fc1_b=fc1_b,
        fc2_w=fc2_w.astype(jnp.bfloat16), fc2_b=fc2_b,
        fc3_w=fc3_w.astype(jnp.bfloat16), fc3_b=fc3_b,
    )


def gcn_net_forward(params, x, edge_index, edge_attr, batch, num_graphs):
    N, in_dim = x.shape
    Fmax = params["Fmax"]
    N_pad = _round_up(N, LANE)

    edge_weight = edge_attr[:, 0]                     # scalar edge weights (see TODO)
    A = build_norm_adj(edge_index, edge_weight, N)    # (N, N) f32
    # TODO(synk): bf16 adjacency/activation quantization compounds over 5
    #             layers (f32 accumulation only); validate vs f32 reference.
    A_p = jnp.zeros((N_pad, N_pad), jnp.bfloat16).at[:N, :N].set(A.astype(jnp.bfloat16))

    # Layer-0 X @ W0 precomputed in XLA (tiny), fed to the fused kernel as the
    # initial XW so the padded input never has to stay resident in VMEM.
    x0 = jnp.zeros((N_pad, Fmax), jnp.bfloat16).at[:N, :in_dim].set(x.astype(jnp.bfloat16))
    xw0 = jnp.dot(x0, params["W"][0],
                  preferred_element_type=jnp.float32).astype(jnp.bfloat16)

    h = fused_gcn(A_p, xw0, params["W"], params["b"],
                  params["scale"], params["shift"])            # (N_pad, Fmax) bf16

    # graph-membership matrix (N_pad, B) + node-validity mask for padding rows
    mt = jnp.zeros((N_pad, num_graphs), jnp.bfloat16).at[jnp.arange(N), batch].set(1.0)
    valid = (jnp.arange(N_pad) < N).astype(jnp.float32)[:, None]

    out = pool_mlp(h, mt, valid,
                   params["gate_w"], params["gate_b"],
                   params["fc1_w"], params["fc1_b"],
                   params["fc2_w"], params["fc2_b"],
                   params["fc3_w"], params["fc3_b"])
    return out.reshape(-1)                            # x.view(-1)


# ----------------------------------------------------------------------------
if __name__ == "__main__":
    key = jax.random.PRNGKey(0)
    k_param, k_x, k_e = jax.random.split(key, 3)

    # Small synthetic problem: 2 graphs x 8 nodes, ring topology per graph.
    in_dim, hidden, edge_dim = 16, 32, 4
    nodes_per_graph, num_graphs = 8, 2
    N = nodes_per_graph * num_graphs

    def ring_edges(offset, n):
        src = jnp.arange(n, dtype=jnp.int32) + offset
        dst = (jnp.arange(n, dtype=jnp.int32) + 1) % n + offset
        fwd = jnp.stack([src, dst])
        bwd = jnp.stack([dst, src])
        return jnp.concatenate([fwd, bwd], axis=1)

    edge_index = jnp.concatenate(
        [ring_edges(0, nodes_per_graph), ring_edges(nodes_per_graph, nodes_per_graph)],
        axis=1)                                                   # (2, 32)
    E = edge_index.shape[1]

    x = jax.random.normal(k_x, (N, in_dim), jnp.float32)          # (16, 16)
    edge_attr = jax.random.uniform(k_e, (E, edge_dim), jnp.float32,
                                   minval=0.1, maxval=1.0)        # (32, 4)
    batch = jnp.repeat(jnp.arange(num_graphs, dtype=jnp.int32), nodes_per_graph)  # (16,)

    params = init_params(k_param, in_dim, hidden, edge_dim)

    out = gcn_net_forward(params, x, edge_index, edge_attr, batch, num_graphs)
    out = jax.block_until_ready(out)

    assert out.shape == (num_graphs,)
    assert bool(jnp.all(jnp.isfinite(out)))
    print("KERNEL_OK")
</pallas_src>

<mosaic_0001>
module attributes {stable_mosaic.version = 11 : i64} {
  func.func @kernel(%arg0: i32, %arg1: i32, %arg2: memref<128x128xbf16, #tpu.memory_space<vmem>>, %arg3: memref<128x128xbf16, #tpu.memory_space<vmem>>, %arg4: memref<1x128x128xbf16, #tpu.memory_space<vmem>>, %arg5: memref<1x1x128xf32, #tpu.memory_space<vmem>>, %arg6: memref<1x1x128xf32, #tpu.memory_space<vmem>>, %arg7: memref<1x1x128xf32, #tpu.memory_space<vmem>>, %arg8: memref<128x128xbf16, #tpu.memory_space<vmem>>, %arg9: memref<128x128xbf16, #tpu.memory_space<vmem>>) attributes {dimension_semantics = [#tpu.dimension_semantics<arbitrary>, #tpu.dimension_semantics<arbitrary>], iteration_bounds = array<i64: 5, 1>, scalar_prefetch = 0 : i64, scratch_operands = 1 : i64, tpu.core_type = #tpu.core_type<tc>, window_params = [{pipeline_mode = #tpu.pipeline_mode<synchronous>, transform_indices = @transform_0, window_bounds = array<i64: 128, 128>}, {pipeline_mode = #tpu.pipeline_mode<synchronous>, transform_indices = @transform_1, window_bounds = array<i64: 128, 128>}, {transform_indices = @transform_2, window_bounds = array<i64: 1, 128, 128>}, {transform_indices = @transform_3, window_bounds = array<i64: 1, 1, 128>}, {transform_indices = @transform_4, window_bounds = array<i64: 1, 1, 128>}, {transform_indices = @transform_5, window_bounds = array<i64: 1, 1, 128>}, {pipeline_mode = #tpu.pipeline_mode<synchronous>, transform_indices = @transform_6, window_bounds = array<i64: 128, 128>}]} {
    %c0_i32 = arith.constant 0 : i32
    %0 = arith.cmpi eq, %arg1, %c0_i32 : i32
    %1 = arith.extui %0 : i1 to i32
    %c0_i32_0 = arith.constant 0 : i32
    %2 = arith.cmpi ne, %1, %c0_i32_0 : i32
    scf.if %2 {
      %c0_i32_15 = arith.constant 0 : i32
      %29 = arith.cmpi eq, %arg0, %c0_i32_15 : i32
      %30 = arith.extui %29 : i1 to i32
      %c0_i32_16 = arith.constant 0 : i32
      %31 = arith.cmpi ne, %30, %c0_i32_16 : i32
      scf.if %31 {
        %c0_19 = arith.constant 0 : index
        %c0_20 = arith.constant 0 : index
        %35 = vector.load %arg3[%c0_19, %c0_20] : memref<128x128xbf16, #tpu.memory_space<vmem>>, vector<128x128xbf16>
        %c0_21 = arith.constant 0 : index
        %c0_22 = arith.constant 0 : index
        %36 = vector.load %arg9[%c0_21, %c0_22] : memref<128x128xbf16, #tpu.memory_space<vmem>>, vector<128x128xbf16>
        tpu.vector_store %arg9[%c0_21, %c0_22], %35 {strides = array<i32>} : memref<128x128xbf16, #tpu.memory_space<vmem>>, vector<128x128xbf16>,
      } else {
      }
      %c0_i32_17 = arith.constant 0 : i32
      %32 = arith.cmpi sgt, %arg0, %c0_i32_17 : i32
      %33 = arith.extui %32 : i1 to i32
      %c0_i32_18 = arith.constant 0 : i32
      %34 = arith.cmpi ne, %33, %c0_i32_18 : i32
      scf.if %34 {
        %c0_19 = arith.constant 0 : index
        %c0_20 = arith.constant 0 : index
        %35 = vector.load %arg8[%c0_19, %c0_20] : memref<128x128xbf16, #tpu.memory_space<vmem>>, vector<128x128xbf16>
        %c0_21 = arith.constant 0 : index
        %c0_22 = arith.constant 0 : index
        %c0_23 = arith.constant 0 : index
        %36 = vector.load %arg4[%c0_21, %c0_22, %c0_23] : memref<1x128x128xbf16, #tpu.memory_space<vmem>>, vector<1x128x128xbf16>
        %37 = vector.shape_cast %36 : vector<1x128x128xbf16> to vector<128x128xbf16>
        %cst_24 = arith.constant dense<0.000000e+00> : vector<128x128xf32>
        %38 = tpu.matmul %35, %37, %cst_24 {dimension_numbers = #tpu.dot_dimension_numbers<[1], [0], [0], [1], [0, 0, 1, 1], [], []>} : vector<128x128xbf16>, vector<128x128xbf16>, vector<128x128xf32> -> vector<128x128xf32>
        %39 = arith.truncf %38 : vector<128x128xf32> to vector<128x128xbf16>
        %c0_25 = arith.constant 0 : index
        %c0_26 = arith.constant 0 : index
        %40 = vector.load %arg9[%c0_25, %c0_26] : memref<128x128xbf16, #tpu.memory_space<vmem>>, vector<128x128xbf16>
        tpu.vector_store %arg9[%c0_25, %c0_26], %39 {strides = array<i32>} : memref<128x128xbf16, #tpu.memory_space<vmem>>, vector<128x128xbf16>,
      } else {
      }
    } else {
    }
    %c128_i32 = arith.constant 128 : i32
    %3 = arith.muli %arg1, %c128_i32 : i32
    %4 = tpu.assume_multiple %3, 128 : i32
    %5 = arith.index_cast %4 : i32 to index
    %c0 = arith.constant 0 : index
    %6 = vector.load %arg2[%5, %c0] : memref<128x128xbf16, #tpu.memory_space<vmem>>, vector<128x128xbf16>
    %c0_1 = arith.constant 0 : index
    %c0_2 = arith.constant 0 : index
    %7 = vector.load %arg9[%c0_1, %c0_2] : memref<128x128xbf16, #tpu.memory_space<vmem>>, vector<128x128xbf16>
    %cst = arith.constant dense<0.000000e+00> : vector<128x128xf32>
    %8 = tpu.matmul %6, %7, %cst {dimension_numbers = #tpu.dot_dimension_numbers<[1], [0], [0], [1], [0, 0, 1, 1], [], []>} : vector<128x128xbf16>, vector<128x128xbf16>, vector<128x128xf32> -> vector<128x128xf32>
    %c0_3 = arith.constant 0 : index
    %c0_4 = arith.constant 0 : index
    %c0_5 = arith.constant 0 : index
    %9 = vector.load %arg5[%c0_3, %c0_4, %c0_5] : memref<1x1x128xf32, #tpu.memory_space<vmem>>, vector<1x1x128xf32>
    %10 = vector.shape_cast %9 : vector<1x1x128xf32> to vector<1x128xf32>
    %11 = vector.broadcast %10 : vector<1x128xf32> to vector<128x128xf32>
    %12 = arith.addf %8, %11 : vector<128x128xf32>
    %cst_6 = arith.constant 0.000000e+00 : f32
    %13 = vector.broadcast %cst_6 : f32 to vector<128x128xf32>
    %14 = arith.cmpf ogt, %12, %13 : vector<128x128xf32>
    %cst_7 = arith.constant 0.00999999977 : f32
    %15 = vector.broadcast %cst_7 : f32 to vector<128x128xf32>
    %16 = arith.mulf %15, %12 : vector<128x128xf32>
    %17 = arith.select %14, %12, %16 : vector<128x128xi1>, vector<128x128xf32>
    %c0_8 = arith.constant 0 : index
    %c0_9 = arith.constant 0 : index
    %c0_10 = arith.constant 0 : index
    %18 = vector.load %arg6[%c0_8, %c0_9, %c0_10] : memref<1x1x128xf32, #tpu.memory_space<vmem>>, vector<1x1x128xf32>
    %19 = vector.shape_cast %18 : vector<1x1x128xf32> to vector<1x128xf32>
    %20 = vector.broadcast %19 : vector<1x128xf32> to vector<128x128xf32>
    %21 = arith.mulf %17, %20 : vector<128x128xf32>
    %c0_11 = arith.constant 0 : index
    %c0_12 = arith.constant 0 : index
    %c0_13 = arith.constant 0 : index
    %22 = vector.load %arg7[%c0_11, %c0_12, %c0_13] : memref<1x1x128xf32, #tpu.memory_space<vmem>>, vector<1x1x128xf32>
    %23 = vector.shape_cast %22 : vector<1x1x128xf32> to vector<1x128xf32>
    %24 = vector.broadcast %23 : vector<1x128xf32> to vector<128x128xf32>
    %25 = arith.addf %21, %24 : vector<128x128xf32>
    %26 = arith.truncf %25 : vector<128x128xf32> to vector<128x128xbf16>
    %27 = arith.index_cast %4 : i32 to index
    %c0_14 = arith.constant 0 : index
    %28 = vector.load %arg8[%27, %c0_14] : memref<128x128xbf16, #tpu.memory_space<vmem>>, vector<128x128xbf16>
    tpu.vector_store %arg8[%27, %c0_14], %26 {strides = array<i32>} : memref<128x128xbf16, #tpu.memory_space<vmem>>, vector<128x128xbf16>,
    return
  }
  func.func @transform_0(%arg0: i32, %arg1: i32) -> (i32, i32) {
    %c0_i32 = arith.constant 0 : i32
    %c0_i32_0 = arith.constant 0 : i32
    %c0_i32_1 = arith.constant 0 : i32
    return %c0_i32, %c0_i32_0 : i32, i32
  }
  func.func @transform_1(%arg0: i32, %arg1: i32) -> (i32, i32) {
    %c0_i32 = arith.constant 0 : i32
    %c0_i32_0 = arith.constant 0 : i32
    %c0_i32_1 = arith.constant 0 : i32
    return %c0_i32, %c0_i32_0 : i32, i32
  }
  func.func @transform_2(%arg0: i32, %arg1: i32) -> (i32, i32, i32) {
    %c0_i32 = arith.constant 0 : i32
    %c0_i32_0 = arith.constant 0 : i32
    %c0_i32_1 = arith.constant 0 : i32
    return %arg0, %c0_i32, %c0_i32_0 : i32, i32, i32
  }
  func.func @transform_3(%arg0: i32, %arg1: i32) -> (i32, i32, i32) {
    %c0_i32 = arith.constant 0 : i32
    %c0_i32_0 = arith.constant 0 : i32
    %c0_i32_1 = arith.constant 0 : i32
    return %arg0, %c0_i32, %c0_i32_0 : i32, i32, i32
  }
  func.func @transform_4(%arg0: i32, %arg1: i32) -> (i32, i32, i32) {
    %c0_i32 = arith.constant 0 : i32
    %c0_i32_0 = arith.constant 0 : i32
    %c0_i32_1 = arith.constant 0 : i32
    return %arg0, %c0_i32, %c0_i32_0 : i32, i32, i32
  }
  func.func @transform_5(%arg0: i32, %arg1: i32) -> (i32, i32, i32) {
    %c0_i32 = arith.constant 0 : i32
    %c0_i32_0 = arith.constant 0 : i32
    %c0_i32_1 = arith.constant 0 : i32
    return %arg0, %c0_i32, %c0_i32_0 : i32, i32, i32
  }
  func.func @transform_6(%arg0: i32, %arg1: i32) -> (i32, i32) {
    %c0_i32 = arith.constant 0 : i32
    %c0_i32_0 = arith.constant 0 : i32
    %c0_i32_1 = arith.constant 0 : i32
    return %c0_i32, %c0_i32_0 : i32, i32
  }
}

</mosaic_0001>

<llo_original>
// kernel: tpu_custom_call.1
$region0: #{tpu_custom_call.1}
  #allocation0 [shape = 'u32[]', space=smem, size = 0x4, offset = 0x4, fixed_abs, tag = 'smem constant byte address 0x4 - core index']
  #allocation1 [shape = 'u32[72,128]{1,0:T(1,128)}', space=vmem, size = 0x9000, scoped, tag = 'internal scratch']
  #allocation2 [shape = 'bf16[128,128]{1,0:T(8,128)(2,1)}', space=vmem, size = 0x8000, scoped, tag = 'scratch operand']
  %s0 = inlined_call_operand.hbm [shape: bf16[128,128], index: 0, kind: input, shape index: {}]
  %s1 = inlined_call_operand.hbm [shape: bf16[128,128], index: 1, kind: input, shape index: {}]
  %s2 = inlined_call_operand.hbm [shape: bf16[5,128,128], index: 2, kind: input, shape index: {}]
  %s3 = inlined_call_operand.hbm [shape: f32[5,1,128], index: 3, kind: input, shape index: {}]
  %s4 = inlined_call_operand.hbm [shape: f32[5,1,128], index: 4, kind: input, shape index: {}]
  %s5 = inlined_call_operand.hbm [shape: f32[5,1,128], index: 5, kind: input, shape index: {}]
  %s6 = inlined_call_operand.hbm [shape: bf16[128,128], index: 6, kind: output, shape index: {}]
  %s7 = sld [smem:[#allocation0]]
  $region93: #{tpu_custom_call.1} parent=0
    _
  %s9 = ssub.s32 1, %s7
  %s10 = scalar_select 0, %s9, %s7
  $region1: #{tpu_custom_call.1} parent=0
    #allocation3 [shape = 'u8[32768]{0}', space=vmem, size = 0x8000, scoped, tag = 'input window, operand 0, single buffered']
    #allocation4 [shape = 's32[2]{0}', space=sflag, size = 0x8, scoped, tag = 'scoped memory for tpu_custom_call.1']
    #allocation5 [shape = 's32[2]{0}', space=sflag, size = 0x8, scoped, tag = 'scoped memory for tpu_custom_call.1']
    #allocation6 [shape = 'u8[32768]{0}', space=vmem, size = 0x8000, scoped, tag = 'input window, operand 1, single buffered']
    #allocation7 [shape = 's32[1]{0}', space=sflag, size = 0x4, scoped, tag = 'scoped memory for tpu_custom_call.1']
    #allocation8 [shape = 'u8[65536]{0}', space=vmem, size = 0x10000, scoped, tag = 'input window, operand 2']
    #allocation9 [shape = 'u8[1024]{0}', space=vmem, size = 0x400, scoped, tag = 'input window, operand 3']
    #allocation10 [shape = 'u8[1024]{0}', space=vmem, size = 0x400, scoped, tag = 'input window, operand 4']
    #allocation11 [shape = 'u8[1024]{0}', space=vmem, size = 0x400, scoped, tag = 'input window, operand 5']
    #allocation12 [shape = 'u8[32768]{0}', space=vmem, size = 0x8000, scoped, tag = 'output window, operand 0, single buffered']
    %11 = vsyncpa [#allocation4], 0
    %12 = vsyncpa [#allocation7], 0
    %13 = vsyncpa [#allocation5], 0
    loop: start=0, step=1, limit=7
    $region2: #{tpu_custom_call.1} parent=1 // loop_pre_header
      _
    $region3: #{tpu_custom_call.1} parent=1 // loop_header
      %s15 = sphi 0, %s19
      %p16 = scmp.ge.s32.totalorder %s15, 7
      %s22 = sphi 0, %s34
      %s23 = sphi 0, %s30
      %s24 = sphi 0, %s22
      %s25 = sphi 0, %s23
      %s26 = sphi 0, %s24
      %s27 = sphi 0, %s25
      %s35 = sphi 0, %s35
      %s37 = sphi 0, %s35
      %s38 = sphi 0, %s37
      %s52 = sphi 0, %s38
      %s56 = sphi 0, %s56
      %s58 = sphi 0, %s56
      %s59 = sphi 0, %s58
      %s73 = sphi 0, %s59
      %s79 = sphi 0, %s81
      %s82 = sphi 0, %s79
      %s83 = sphi 0, %s82
      %s99 = sphi 0, %s83
      %s105 = sphi 0, %s107
      %s108 = sphi 0, %s105
      %s109 = sphi 0, %s108
      %s125 = sphi 0, %s109
      %s131 = sphi 0, %s133
      %s134 = sphi 0, %s131
      %s135 = sphi 0, %s134
      %s151 = sphi 0, %s135
      %s157 = sphi 0, %s159
      %s160 = sphi 0, %s157
      %s161 = sphi 0, %s160
      %s177 = sphi 0, %s161
      %s181 = sphi 0, %s181
      %s183 = sphi 0, %s181
      %s184 = sphi 0, %s183
      %s198 = sphi 0, %s184
    $region4: #{tpu_custom_call.1} parent=1 // loop_header_branch
      %18 = sbr.rel (%p16) target = $region8
    $region5: #{tpu_custom_call.1} parent=1 // loop_body
      %s20 = ssub.s32 %s15, 1
      %s21 = ssub.s32 %s15, 2
      %s28 = sadd.s32 1, %s23
      %p29 = scmp.ge.s32.totalorder %s28, 1
      %s30 = scalar_select %p29, 0, %s28
      %s31 = sadd.s32 1, %s22
      %s32 = scalar_select %p29, %s31, %s22
      %p33 = scmp.ge.s32.totalorder %s32, 5
      %s34 = scalar_select %p33, 0, %s32
      %s36 = sadd.s32 %s35, 1
      %p39 = scmp.eq.s32.totalorder %s15, 4
      %p40 = scmp.ne.s32.totalorder %s35, %s37
      %p41 = scmp.eq.s32.totalorder %s15, 0
      %p42 = por %p40, %p41
      %p43 = scmp.ne.s32.totalorder %s35, %s37
      %p44 = scmp.eq.s32.totalorder %s20, 4
      %p45 = por %p43, %p44
      %p46 = scmp.ne.s32.totalorder %s37, %s38
      %p47 = scmp.eq.s32.totalorder %s20, 0
      %p48 = por %p46, %p47
      %p49 = scmp.ne.s32.totalorder %s37, %s38
      %p50 = scmp.eq.s32.totalorder %s21, 4
      %p51 = por %p49, %p50
      %p53 = scmp.ne.s32.totalorder %s38, %s52
      %p54 = scmp.eq.s32.totalorder %s21, 0
      %p55 = por %p53, %p54
      %s57 = sadd.s32 %s56, 1
      %p60 = scmp.eq.s32.totalorder %s15, 4
      %p61 = scmp.ne.s32.totalorder %s56, %s58
      %p62 = scmp.eq.s32.totalorder %s15, 0
      %p63 = por %p61, %p62
      %p64 = scmp.ne.s32.totalorder %s56, %s58
      %p65 = scmp.eq.s32.totalorder %s20, 4
      %p66 = por %p64, %p65
      %p67 = scmp.ne.s32.totalorder %s58, %s59
      %p68 = scmp.eq.s32.totalorder %s20, 0
      %p69 = por %p67, %p68
      %p70 = scmp.ne.s32.totalorder %s58, %s59
      %p71 = scmp.eq.s32.totalorder %s21, 4
      %p72 = por %p70, %p71
      %p74 = scmp.ne.s32.totalorder %s59, %s73
      %p75 = scmp.eq.s32.totalorder %s21, 0
      %p76 = por %p74, %p75
      %s77 = ssub.s32 %s22, %s34
      %p78 = scmp.eq.s32.totalorder %s77, 0
      %s80 = sadd.s32 %s79, 1
      %s81 = scalar_select %p78, %s79, %s80
      %p84 = pneg %p78
      %p85 = scmp.eq.s32.totalorder %s15, 4
      %p86 = por %p84, %p85
      %p87 = scmp.ne.s32.totalorder %s79, %s82
      %p88 = scmp.eq.s32.totalorder %s15, 0
      %p89 = por %p87, %p88
      %p90 = scmp.ne.s32.totalorder %s79, %s82
      %p91 = scmp.eq.s32.totalorder %s20, 4
      %p92 = por %p90, %p91
      %p93 = scmp.ne.s32.totalorder %s82, %s83
      %p94 = scmp.eq.s32.totalorder %s20, 0
      %p95 = por %p93, %p94
      %p96 = scmp.ne.s32.totalorder %s82, %s83
      %p97 = scmp.eq.s32.totalorder %s21, 4
      %p98 = por %p96, %p97
      %p100 = scmp.ne.s32.totalorder %s83, %s99
      %p101 = scmp.eq.s32.totalorder %s21, 0
      %p102 = por %p100, %p101
      %s103 = ssub.s32 %s22, %s34
      %p104 = scmp.eq.s32.totalorder %s103, 0
      %s106 = sadd.s32 %s105, 1
      %s107 = scalar_select %p104, %s105, %s106
      %p110 = pneg %p104
      %p111 = scmp.eq.s32.totalorder %s15, 4
      %p112 = por %p110, %p111
      %p113 = scmp.ne.s32.totalorder %s105, %s108
      %p114 = scmp.eq.s32.totalorder %s15, 0
      %p115 = por %p113, %p114
      %p116 = scmp.ne.s32.totalorder %s105, %s108
      %p117 = scmp.eq.s32.totalorder %s20, 4
      %p118 = por %p116, %p117
      %p119 = scmp.ne.s32.totalorder %s108, %s109
      %p120 = scmp.eq.s32.totalorder %s20, 0
      %p121 = por %p119, %p120
      %p122 = scmp.ne.s32.totalorder %s108, %s109
      %p123 = scmp.eq.s32.totalorder %s21, 4
      %p124 = por %p122, %p123
      %p126 = scmp.ne.s32.totalorder %s109, %s125
      %p127 = scmp.eq.s32.totalorder %s21, 0
      %p128 = por %p126, %p127
      %s129 = ssub.s32 %s22, %s34
      %p130 = scmp.eq.s32.totalorder %s129, 0
      %s132 = sadd.s32 %s131, 1
      %s133 = scalar_select %p130, %s131, %s132
      %p136 = pneg %p130
      %p137 = scmp.eq.s32.totalorder %s15, 4
      %p138 = por %p136, %p137
      %p139 = scmp.ne.s32.totalorder %s131, %s134
      %p140 = scmp.eq.s32.totalorder %s15, 0
      %p141 = por %p139, %p140
      %p142 = scmp.ne.s32.totalorder %s131, %s134
      %p143 = scmp.eq.s32.totalorder %s20, 4
      %p144 = por %p142, %p143
      %p145 = scmp.ne.s32.totalorder %s134, %s135
      %p146 = scmp.eq.s32.totalorder %s20, 0
      %p147 = por %p145, %p146
      %p148 = scmp.ne.s32.totalorder %s134, %s135
      %p149 = scmp.eq.s32.totalorder %s21, 4
      %p150 = por %p148, %p149
      %p152 = scmp.ne.s32.totalorder %s135, %s151
      %p153 = scmp.eq.s32.totalorder %s21, 0
      %p154 = por %p152, %p153
      %s155 = ssub.s32 %s22, %s34
      %p156 = scmp.eq.s32.totalorder %s155, 0
      %s158 = sadd.s32 %s157, 1
      %s159 = scalar_select %p156, %s157, %s158
      %p162 = pneg %p156
      %p163 = scmp.eq.s32.totalorder %s15, 4
      %p164 = por %p162, %p163
      %p165 = scmp.ne.s32.totalorder %s157, %s160
      %p166 = scmp.eq.s32.totalorder %s15, 0
      %p167 = por %p165, %p166
      %p168 = scmp.ne.s32.totalorder %s157, %s160
      %p169 = scmp.eq.s32.totalorder %s20, 4
      %p170 = por %p168, %p169
      %p171 = scmp.ne.s32.totalorder %s160, %s161
      %p172 = scmp.eq.s32.totalorder %s20, 0
      %p173 = por %p171, %p172
      %p174 = scmp.ne.s32.totalorder %s160, %s161
      %p175 = scmp.eq.s32.totalorder %s21, 4
      %p176 = por %p174, %p175
      %p178 = scmp.ne.s32.totalorder %s161, %s177
      %p179 = scmp.eq.s32.totalorder %s21, 0
      %p180 = por %p178, %p179
      %s182 = sadd.s32 %s181, 1
      %p185 = scmp.eq.s32.totalorder %s15, 4
      %p186 = scmp.ne.s32.totalorder %s181, %s183
      %p187 = scmp.eq.s32.totalorder %s15, 0
      %p188 = por %p186, %p187
      %p189 = scmp.ne.s32.totalorder %s181, %s183
      %p190 = scmp.eq.s32.totalorder %s20, 4
      %p191 = por %p189, %p190
      %p192 = scmp.ne.s32.totalorder %s183, %s184
      %p193 = scmp.eq.s32.totalorder %s20, 0
      %p194 = por %p192, %p193
      %p195 = scmp.ne.s32.totalorder %s183, %s184
      %p196 = scmp.eq.s32.totalorder %s21, 4
      %p197 = por %p195, %p196
      %p199 = scmp.ne.s32.totalorder %s184, %s198
      %p200 = scmp.eq.s32.totalorder %s21, 0
      %p201 = por %p199, %p200
      %p202 = scmp.le.s32.totalorder 1, %s15
      %p203 = scmp.lt.s32.totalorder %s15, 6
      %p204 = pnand %p202, %p203
      %p205 = pneg %p204
      // Predicated region
      $region9: #{tpu_custom_call.1} parent=5 // pred_check
        _
      $region10: #{tpu_custom_call.1} parent=5 // pred_check_branch
        %207 = sbr.rel (%p204) target = $region12
      $region11: #{tpu_custom_call.1} parent=5 // pred_region
        %s208 = ssub.s32 %s15, 1
        // Predicated region
        $region13: #{tpu_custom_call.1} parent=11 // pred_check
          %p209 = pneg %p48
        $region14: #{tpu_custom_call.1} parent=11 // pred_check_branch
          %211 = sbr.rel (%p209) target = $region16
        $region15: #{tpu_custom_call.1} parent=11 // pred_region
          %213 = vsyncadd [#allocation4], 0
          %s214 = sshll.u32 %s0, 4
          %s215 = int_to_ptr.hbm [resolvable:$true] %s214
          %s216 = sshll.u32 [#allocation3], 4
          %s217 = int_to_ptr.vmem [resolvable:$true] %s216
          %222 = dma.hbm_to_vmem [thread:$0]  %s215, 1024, %s217, [#allocation4], 64, 64, 4
        $region16: #{tpu_custom_call.1} parent=11 // pred_fallthru
          _
        // Predicated region
        $region17: #{tpu_custom_call.1} parent=11 // pred_check
          %p223 = pneg %p69
        $region18: #{tpu_custom_call.1} parent=11 // pred_check_branch
          %225 = sbr.rel (%p223) target = $region20
        $region19: #{tpu_custom_call.1} parent=11 // pred_region
          %227 = vsyncadd [#allocation7], 0
          %s228 = sshll.u32 %s1, 4
          %s229 = int_to_ptr.hbm [resolvable:$true] %s228
          %s230 = sshll.u32 [#allocation6], 4
          %s231 = int_to_ptr.vmem [resolvable:$true] %s230
          %236 = dma.hbm_to_vmem [thread:$0]  %s229, 1024, %s231, [#allocation7], 64, 64, 4
        $region20: #{tpu_custom_call.1} parent=11 // pred_fallthru
          _
      $region12: #{tpu_custom_call.1} parent=5 // pred_fallthru
        _
      %p237 = scmp.lt.s32.totalorder %s15, 5
      // Predicated region
      $region21: #{tpu_custom_call.1} parent=5 // pred_check
        %p238 = pneg %p237
      $region22: #{tpu_custom_call.1} parent=5 // pred_check_branch
        %240 = sbr.rel (%p238) target = $region24
      $region23: #{tpu_custom_call.1} parent=5 // pred_region
        // Predicated region
        $region25: #{tpu_custom_call.1} parent=23 // pred_check
          %p241 = pneg %p89
        $region26: #{tpu_custom_call.1} parent=23 // pred_check_branch
          %243 = sbr.rel (%p241) target = $region28
        $region27: #{tpu_custom_call.1} parent=23 // pred_region
          %s244 = sand.u32 %s15, 1
          %s245 = scalar_lea.sflag [#allocation4], %s244
          %s246 = sand.u32 %s79, 1
          %s247 = smul.addr %s246, 64
          %s248 = scalar_lea.vmem [#allocation8], %s247
          %250 = vsyncadd %s245, 0
          %s251 = smul.addr %s22, 16
          %s252 = smul.addr %s251, 4
          %s253 = scalar_lea.hbm %s2, %s252
          %s254 = sshll.u32 %s253, 4
          %s255 = int_to_ptr.hbm [resolvable:$true] %s254
          %s256 = sshll.u32 %s248, 4
          %s257 = int_to_ptr.vmem [resolvable:$true] %s256
          %262 = dma.hbm_to_vmem [thread:$0]  %s255, 1024, %s257, %s245, 64, 64, 4
        $region28: #{tpu_custom_call.1} parent=23 // pred_fallthru
          _
        // Predicated region
        $region29: #{tpu_custom_call.1} parent=23 // pred_check
          %p263 = pneg %p115
        $region30: #{tpu_custom_call.1} parent=23 // pred_check_branch
          %265 = sbr.rel (%p263) target = $region32
        $region31: #{tpu_custom_call.1} parent=23 // pred_region
          %s266 = sand.u32 %s15, 1
          %s267 = scalar_lea.sflag [#allocation4], %s266
          %s268 = sand.u32 %s105, 1
          %s269 = scalar_lea.vmem [#allocation9], %s268
          %271 = vsyncadd %s267, 0
          %s272 = scalar_lea.hbm %s3, %s22
          %s274 = sshll.u32 %s272, 4
          %s275 = int_to_ptr.hbm [resolvable:$true] %s274
          %s276 = sshll.u32 %s269, 4
          %s277 = int_to_ptr.vmem [resolvable:$true] %s276
          %279 = dma.hbm_to_vmem [thread:$0]  %s275, 16, %s277, %s267
        $region32: #{tpu_custom_call.1} parent=23 // pred_fallthru
          _
        // Predicated region
        $region33: #{tpu_custom_call.1} parent=23 // pred_check
          %p280 = pneg %p141
        $region34: #{tpu_custom_call.1} parent=23 // pred_check_branch
          %282 = sbr.rel (%p280) target = $region36
        $region35: #{tpu_custom_call.1} parent=23 // pred_region
          %s283 = sand.u32 %s15, 1
          %s284 = scalar_lea.sflag [#allocation4], %s283
          %s285 = sand.u32 %s131, 1
          %s286 = scalar_lea.vmem [#allocation10], %s285
          %288 = vsyncadd %s284, 0
          %s289 = scalar_lea.hbm %s4, %s22
          %s291 = sshll.u32 %s289, 4
          %s292 = int_to_ptr.hbm [resolvable:$true] %s291
          %s293 = sshll.u32 %s286, 4
          %s294 = int_to_ptr.vmem [resolvable:$true] %s293
          %296 = dma.hbm_to_vmem [thread:$0]  %s292, 16, %s294, %s284
        $region36: #{tpu_custom_call.1} parent=23 // pred_fallthru
          _
        // Predicated region
        $region37: #{tpu_custom_call.1} parent=23 // pred_check
          %p297 = pneg %p167
        $region38: #{tpu_custom_call.1} parent=23 // pred_check_branch
          %299 = sbr.rel (%p297) target = $region40
        $region39: #{tpu_custom_call.1} parent=23 // pred_region
          %s300 = sand.u32 %s15, 1
          %s301 = scalar_lea.sflag [#allocation4], %s300
          %s302 = sand.u32 %s157, 1
          %s303 = scalar_lea.vmem [#allocation11], %s302
          %305 = vsyncadd %s301, 0
          %s306 = scalar_lea.hbm %s5, %s22
          %s308 = sshll.u32 %s306, 4
          %s309 = int_to_ptr.hbm [resolvable:$true] %s308
          %s310 = sshll.u32 %s303, 4
          %s311 = int_to_ptr.vmem [resolvable:$true] %s310
          %313 = dma.hbm_to_vmem [thread:$0]  %s309, 16, %s311, %s301
        $region40: #{tpu_custom_call.1} parent=23 // pred_fallthru
          _
      $region24: #{tpu_custom_call.1} parent=5 // pred_fallthru
        _
      %p314 = scmp.le.s32.totalorder 1, %s15
      %p315 = scmp.lt.s32.totalorder %s15, 6
      %p316 = pnand %p314, %p315
      %p317 = pneg %p316
      // Predicated region
      $region41: #{tpu_custom_call.1} parent=5 // pred_check
        _
      $region42: #{tpu_custom_call.1} parent=5 // pred_check_branch
        %319 = sbr.rel (%p316) target = $region44
      $region43: #{tpu_custom_call.1} parent=5 // pred_region
        %s320 = ssub.s32 %s15, 1
        // Predicated region
        $region45: #{tpu_custom_call.1} parent=43 // pred_check
          %p321 = pneg %p48
        $region46: #{tpu_custom_call.1} parent=43 // pred_check_branch
          %323 = sbr.rel (%p321) target = $region48
        $region47: #{tpu_custom_call.1} parent=43 // pred_region
          %325 = dma.done [#allocation4], 1024
        $region48: #{tpu_custom_call.1} parent=43 // pred_fallthru
          _
        // Predicated region
        $region49: #{tpu_custom_call.1} parent=43 // pred_check
          %p326 = pneg %p69
        $region50: #{tpu_custom_call.1} parent=43 // pred_check_branch
          %328 = sbr.rel (%p326) target = $region52
        $region51: #{tpu_custom_call.1} parent=43 // pred_region
          %330 = dma.done [#allocation7], 1024
        $region52: #{tpu_custom_call.1} parent=43 // pred_fallthru
          _
        %s331 = sand.u32 %s20, 1
        %s332 = scalar_lea.sflag [#allocation4], %s331
        %s333 = sand.u32 %s82, 1
        %s334 = smul.addr %s333, 64
        %s335 = scalar_lea.vmem [#allocation8], %s334
        // Predicated region
        $region53: #{tpu_custom_call.1} parent=43 // pred_check
          %p336 = pneg %p95
        $region54: #{tpu_custom_call.1} parent=43 // pred_check_branch
          %338 = sbr.rel (%p336) target = $region56
        $region55: #{tpu_custom_call.1} parent=43 // pred_region
          %340 = dma.done %s332, 1024
        $region56: #{tpu_custom_call.1} parent=43 // pred_fallthru
          _
        %s341 = sand.u32 %s20, 1
        %s342 = scalar_lea.sflag [#allocation4], %s341
        %s343 = sand.u32 %s108, 1
        %s344 = scalar_lea.vmem [#allocation9], %s343
        // Predicated region
        $region57: #{tpu_custom_call.1} parent=43 // pred_check
          %p345 = pneg %p121
        $region58: #{tpu_custom_call.1} parent=43 // pred_check_branch
          %347 = sbr.rel (%p345) target = $region60
        $region59: #{tpu_custom_call.1} parent=43 // pred_region
          %349 = dma.done %s342, 16
        $region60: #{tpu_custom_call.1} parent=43 // pred_fallthru
          _
        %s350 = sand.u32 %s20, 1
        %s351 = scalar_lea.sflag [#allocation4], %s350
        %s352 = sand.u32 %s134, 1
        %s353 = scalar_lea.vmem [#allocation10], %s352
        // Predicated region
        $region61: #{tpu_custom_call.1} parent=43 // pred_check
          %p354 = pneg %p147
        $region62: #{tpu_custom_call.1} parent=43 // pred_check_branch
          %356 = sbr.rel (%p354) target = $region64
        $region63: #{tpu_custom_call.1} parent=43 // pred_region
          %358 = dma.done %s351, 16
        $region64: #{tpu_custom_call.1} parent=43 // pred_fallthru
          _
        %s359 = sand.u32 %s20, 1
        %s360 = scalar_lea.sflag [#allocation4], %s359
        %s361 = sand.u32 %s160, 1
        %s362 = scalar_lea.vmem [#allocation11], %s361
        // Predicated region
        $region65: #{tpu_custom_call.1} parent=43 // pred_check
          %p363 = pneg %p173
        $region66: #{tpu_custom_call.1} parent=43 // pred_check_branch
          %365 = sbr.rel (%p363) target = $region68
        $region67: #{tpu_custom_call.1} parent=43 // pred_region
          %367 = dma.done %s360, 16
        $region68: #{tpu_custom_call.1} parent=43 // pred_fallthru
          _
        %p368 = pneg %p48
        %p369 = pneg %p45
        %p370 = pneg %p69
        %p371 = pneg %p66
        %s372 = sand.u32 %s20, 1
        %s373 = scalar_lea.sflag [#allocation4], %s372
        %s374 = sand.u32 %s82, 1
        %s375 = smul.addr %s374, 64
        %s376 = scalar_lea.vmem [#allocation8], %s375
        %p377 = pneg %p95
        %p378 = pneg %p92
        %s379 = sand.u32 %s20, 1
        %s380 = scalar_lea.sflag [#allocation4], %s379
        %s381 = sand.u32 %s108, 1
        %s382 = scalar_lea.vmem [#allocation9], %s381
        %p383 = pneg %p121
        %p384 = pneg %p118
        %s385 = sand.u32 %s20, 1
        %s386 = scalar_lea.sflag [#allocation4], %s385
        %s387 = sand.u32 %s134, 1
        %s388 = scalar_lea.vmem [#allocation10], %s387
        %p389 = pneg %p147
        %p390 = pneg %p144
        %s391 = sand.u32 %s20, 1
        %s392 = scalar_lea.sflag [#allocation4], %s391
        %s393 = sand.u32 %s160, 1
        %s394 = scalar_lea.vmem [#allocation11], %s393
        %p395 = pneg %p173
        %p396 = pneg %p170
        %p397 = pneg %p194
        %p398 = pneg %p191
        %p399 = scmp.eq.s32.totalorder %s25, 0
        // Predicated region
        $region69: #{tpu_custom_call.1} parent=43 // pred_check
          %p400 = pneg %p399
        $region70: #{tpu_custom_call.1} parent=43 // pred_check_branch
          %402 = sbr.rel (%p400) target = $region72
        $region71: #{tpu_custom_call.1} parent=43 // pred_region
          %p403 = scmp.eq.s32.totalorder %s24, 0
          // Predicated region
          $region73: #{tpu_custom_call.1} parent=71 // pred_check
            %p404 = pneg %p403
          $region74: #{tpu_custom_call.1} parent=71 // pred_check_branch
            %406 = sbr.rel (%p404) target = $region76
          $region75: #{tpu_custom_call.1} parent=71 // pred_region
            %v407 = vld [vmem:[#allocation6] sm:$0xf]
            %v408 = vld [vmem:[#allocation6 + $0x4] sm:$0xf]
            %v409 = vld [vmem:[#allocation6 + $0x8] sm:$0xf]
            %v410 = vld [vmem:[#allocation6 + $0xc] sm:$0xf]
            %v411 = vld [vmem:[#allocation6 + $0x10] sm:$0xf]
            %v412 = vld [vmem:[#allocation6 + $0x14] sm:$0xf]
            %v413 = vld [vmem:[#allocation6 + $0x18] sm:$0xf]
            %v414 = vld [vmem:[#allocation6 + $0x1c] sm:$0xf]
            %v415 = vld [vmem:[#allocation6 + $0x20] sm:$0xf]
            %v416 = vld [vmem:[#allocation6 + $0x24] sm:$0xf]
            %v417 = vld [vmem:[#allocation6 + $0x28] sm:$0xf]
            %v418 = vld [vmem:[#allocation6 + $0x2c] sm:$0xf]
            %v419 = vld [vmem:[#allocation6 + $0x30] sm:$0xf]
            %v420 = vld [vmem:[#allocation6 + $0x34] sm:$0xf]
            %v421 = vld [vmem:[#allocation6 + $0x38] sm:$0xf]
            %v422 = vld [vmem:[#allocation6 + $0x3c] sm:$0xf]
            %423 = vst [vmem:[#allocation2] sm:$0xf] %v407
            %424 = vst [vmem:[#allocation2 + $0x4] sm:$0xf] %v408
            %425 = vst [vmem:[#allocation2 + $0x8] sm:$0xf] %v409
            %426 = vst [vmem:[#allocation2 + $0xc] sm:$0xf] %v410
            %427 = vst [vmem:[#allocation2 + $0x10] sm:$0xf] %v411
            %428 = vst [vmem:[#allocation2 + $0x14] sm:$0xf] %v412
            %429 = vst [vmem:[#allocation2 + $0x18] sm:$0xf] %v413
            %430 = vst [vmem:[#allocation2 + $0x1c] sm:$0xf] %v414
            %431 = vst [vmem:[#allocation2 + $0x20] sm:$0xf] %v415
            %432 = vst [vmem:[#allocation2 + $0x24] sm:$0xf] %v416
            %433 = vst [vmem:[#allocation2 + $0x28] sm:$0xf] %v417
            %434 = vst [vmem:[#allocation2 + $0x2c] sm:$0xf] %v418
            %435 = vst [vmem:[#allocation2 + $0x30] sm:$0xf] %v419
            %436 = vst [vmem:[#allocation2 + $0x34] sm:$0xf] %v420
            %437 = vst [vmem:[#allocation2 + $0x38] sm:$0xf] %v421
            %438 = vst [vmem:[#allocation2 + $0x3c] sm:$0xf] %v422
          $region76: #{tpu_custom_call.1} parent=71 // pred_fallthru
            _
          %p439 = scmp.gt.s32.totalorder %s24, 0
          // Predicated region
          $region77: #{tpu_custom_call.1} parent=71 // pred_check
            %p440 = pneg %p439
          $region78: #{tpu_custom_call.1} parent=71 // pred_check_branch
            %442 = sbr.rel (%p440) target = $region80
          $region79: #{tpu_custom_call.1} parent=71 // pred_region
            %v443 = vld [vmem:[#allocation12] sm:$0xf]
            %v444 = vld [vmem:[#allocation12 + $0x4] sm:$0xf]
            %v445 = vld [vmem:[#allocation12 + $0x8] sm:$0xf]
            %v446 = vld [vmem:[#allocation12 + $0xc] sm:$0xf]
            %v447 = vld [vmem:[#allocation12 + $0x10] sm:$0xf]
            %v448 = vld [vmem:[#allocation12 + $0x14] sm:$0xf]
            %v449 = vld [vmem:[#allocation12 + $0x18] sm:$0xf]
            %v450 = vld [vmem:[#allocation12 + $0x1c] sm:$0xf]
            %v451 = vld [vmem:[#allocation12 + $0x20] sm:$0xf]
            %v452 = vld [vmem:[#allocation12 + $0x24] sm:$0xf]
            %v453 = vld [vmem:[#allocation12 + $0x28] sm:$0xf]
            %v454 = vld [vmem:[#allocation12 + $0x2c] sm:$0xf]
            %v455 = vld [vmem:[#allocation12 + $0x30] sm:$0xf]
            %v456 = vld [vmem:[#allocation12 + $0x34] sm:$0xf]
            %v457 = vld [vmem:[#allocation12 + $0x38] sm:$0xf]
            %v458 = vld [vmem:[#allocation12 + $0x3c] sm:$0xf]
            %v459 = vld [vmem:[%s335] sm:$0xf]
            %v460 = vld [vmem:[%s335 + $0x4] sm:$0xf]
            %v461 = vld [vmem:[%s335 + $0x8] sm:$0xf]
            %v462 = vld [vmem:[%s335 + $0xc] sm:$0xf]
            %v463 = vld [vmem:[%s335 + $0x10] sm:$0xf]
            %v464 = vld [vmem:[%s335 + $0x14] sm:$0xf]
            %v465 = vld [vmem:[%s335 + $0x18] sm:$0xf]
            %v466 = vld [vmem:[%s335 + $0x1c] sm:$0xf]
            %v467 = vld [vmem:[%s335 + $0x20] sm:$0xf]
            %v468 = vld [vmem:[%s335 + $0x24] sm:$0xf]
            %v469 = vld [vmem:[%s335 + $0x28] sm:$0xf]
            %v470 = vld [vmem:[%s335 + $0x2c] sm:$0xf]
            %v471 = vld [vmem:[%s335 + $0x30] sm:$0xf]
            %v472 = vld [vmem:[%s335 + $0x34] sm:$0xf]
            %v473 = vld [vmem:[%s335 + $0x38] sm:$0xf]
            %v474 = vld [vmem:[%s335 + $0x3c] sm:$0xf]
            %v491 = vunpack.c.l.b16 %v443
            %v492 = vunpack.c.l.b16 %v444
            %v493 = vunpack.c.l.b16 %v445
            %v494 = vunpack.c.l.b16 %v446
            %v495 = vunpack.c.l.b16 %v447
            %v496 = vunpack.c.l.b16 %v448
            %v497 = vunpack.c.l.b16 %v449
            %v498 = vunpack.c.l.b16 %v450
            %v499 = vunpack.c.l.b16 %v451
            %v500 = vunpack.c.l.b16 %v452
            %v501 = vunpack.c.l.b16 %v453
            %v502 = vunpack.c.l.b16 %v454
            %v503 = vunpack.c.l.b16 %v455
            %v504 = vunpack.c.l.b16 %v456
            %v505 = vunpack.c.l.b16 %v457
            %v506 = vunpack.c.l.b16 %v458
            %v507 = vpack.c.b16 %v492, %v491
            %v508 = vpack.c.b16 %v494, %v493
            %v509 = vpack.c.b16 %v496, %v495
            %v510 = vpack.c.b16 %v498, %v497
            %v511 = vpack.c.b16 %v500, %v499
            %v512 = vpack.c.b16 %v502, %v501
            %v513 = vpack.c.b16 %v504, %v503
            %v514 = vpack.c.b16 %v506, %v505
            %v539 = vunpack.c.l.b16 %v459
            %v540 = vunpack.c.l.b16 %v460
            %v541 = vunpack.c.l.b16 %v461
            %v542 = vunpack.c.l.b16 %v462
            %v543 = vunpack.c.l.b16 %v463
            %v544 = vunpack.c.l.b16 %v464
            %v545 = vunpack.c.l.b16 %v465
            %v546 = vunpack.c.l.b16 %v466
            %v547 = vunpack.c.l.b16 %v467
            %v548 = vunpack.c.l.b16 %v468
            %v549 = vunpack.c.l.b16 %v469
            %v550 = vunpack.c.l.b16 %v470
            %v551 = vunpack.c.l.b16 %v471
            %v552 = vunpack.c.l.b16 %v472
            %v553 = vunpack.c.l.b16 %v473
            %v554 = vunpack.c.l.b16 %v474
            %v555 = vpack.c.b16 %v540, %v539
            %v556 = vpack.c.b16 %v542, %v541
            %v557 = vpack.c.b16 %v544, %v543
            %v558 = vpack.c.b16 %v546, %v545
            %v559 = vpack.c.b16 %v548, %v547
            %v560 = vpack.c.b16 %v550, %v549
            %v561 = vpack.c.b16 %v552, %v551
            %v562 = vpack.c.b16 %v554, %v553
            %571 = vmatpush.bf16.msra.mxu0 %v562
            %572 = vmatpush.bf16.msra.mxu0 %v561
            %573 = vmatpush.bf16.msra.mxu0 %v560
            %574 = vmatpush.bf16.msra.mxu0 %v559
            %575 = vmatpush.bf16.msra.mxu0 %v558
            %576 = vmatpush.bf16.msra.mxu0 %v557
            %577 = vmatpush.bf16.msra.mxu0 %v556
            %578 = vmatpush.bf16.msra.mxu0 %v555
            %579 = vmatmul.bf16.gmra.mxu0 %v507
            %v580 = vpop.f32.mrf.mxu0
            %v581 = vadd.f32 0.0, %v580
            %v582 = vpop.f32.mrf.mxu0
            %v583 = vadd.f32 0.0, %v582
            %584 = vmatmul.bf16.gmra.mxu0 %v508
            %v585 = vpop.f32.mrf.mxu0
            %v586 = vadd.f32 0.0, %v585
            %v587 = vpop.f32.mrf.mxu0
            %v588 = vadd.f32 0.0, %v587
            %589 = vmatmul.bf16.gmra.mxu0 %v509
            %v590 = vpop.f32.mrf.mxu0
            %v591 = vadd.f32 0.0, %v590
            %v592 = vpop.f32.mrf.mxu0
            %v593 = vadd.f32 0.0, %v592
            %594 = vmatmul.bf16.gmra.mxu0 %v510
            %v595 = vpop.f32.mrf.mxu0
            %v596 = vadd.f32 0.0, %v595
            %v597 = vpop.f32.mrf.mxu0
            %v598 = vadd.f32 0.0, %v597
            %599 = vmatmul.bf16.gmra.mxu0 %v511
            %v600 = vpop.f32.mrf.mxu0
            %v601 = vadd.f32 0.0, %v600
            %v602 = vpop.f32.mrf.mxu0
            %v603 = vadd.f32 0.0, %v602
            %604 = vmatmul.bf16.gmra.mxu0 %v512
            %v605 = vpop.f32.mrf.mxu0
            %v606 = vadd.f32 0.0, %v605
            %v607 = vpop.f32.mrf.mxu0
            %v608 = vadd.f32 0.0, %v607
            %609 = vmatmul.bf16.gmra.mxu0 %v513
            %v610 = vpop.f32.mrf.mxu0
            %v611 = vadd.f32 0.0, %v610
            %v612 = vpop.f32.mrf.mxu0
            %v613 = vadd.f32 0.0, %v612
            %614 = vmatmul.bf16.gmra.mxu0 %v514
            %v615 = vpop.f32.mrf.mxu0
            %v616 = vadd.f32 0.0, %v615
            %v617 = vpop.f32.mrf.mxu0
            %v618 = vadd.f32 0.0, %v617
            %619 = vdwg.mxu0
            %v620 = vpack.c.bf16 %v581, %v581
            %v621 = vpack.c.bf16 %v583, %v583
            %v622 = vpack.c.bf16 %v586, %v586
            %v623 = vpack.c.bf16 %v588, %v588
            %v624 = vpack.c.bf16 %v591, %v591
            %v625 = vpack.c.bf16 %v593, %v593
            %v626 = vpack.c.bf16 %v596, %v596
            %v627 = vpack.c.bf16 %v598, %v598
            %v628 = vpack.c.bf16 %v601, %v601
            %v629 = vpack.c.bf16 %v603, %v603
            %v630 = vpack.c.bf16 %v606, %v606
            %v631 = vpack.c.bf16 %v608, %v608
            %v632 = vpack.c.bf16 %v611, %v611
            %v633 = vpack.c.bf16 %v613, %v613
            %v634 = vpack.c.bf16 %v616, %v616
            %v635 = vpack.c.bf16 %v618, %v618
            %636 = vst [vmem:[#allocation2] sm:$0xf] %v620
            %637 = vst [vmem:[#allocation2 + $0x4] sm:$0xf] %v621
            %638 = vst [vmem:[#allocation2 + $0x8] sm:$0xf] %v622
            %639 = vst [vmem:[#allocation2 + $0xc] sm:$0xf] %v623
            %640 = vst [vmem:[#allocation2 + $0x10] sm:$0xf] %v624
            %641 = vst [vmem:[#allocation2 + $0x14] sm:$0xf] %v625
            %642 = vst [vmem:[#allocation2 + $0x18] sm:$0xf] %v626
            %643 = vst [vmem:[#allocation2 + $0x1c] sm:$0xf] %v627
            %644 = vst [vmem:[#allocation2 + $0x20] sm:$0xf] %v628
            %645 = vst [vmem:[#allocation2 + $0x24] sm:$0xf] %v629
            %646 = vst [vmem:[#allocation2 + $0x28] sm:$0xf] %v630
            %647 = vst [vmem:[#allocation2 + $0x2c] sm:$0xf] %v631
            %648 = vst [vmem:[#allocation2 + $0x30] sm:$0xf] %v632
            %649 = vst [vmem:[#allocation2 + $0x34] sm:$0xf] %v633
            %650 = vst [vmem:[#allocation2 + $0x38] sm:$0xf] %v634
            %651 = vst [vmem:[#allocation2 + $0x3c] sm:$0xf] %v635
          $region80: #{tpu_custom_call.1} parent=71 // pred_fallthru
            _
        $region72: #{tpu_custom_call.1} parent=43 // pred_fallthru
          _
        %s652 = smul.u32 %s25, 128
        %s653 = sshra.s32 %s652, 3
        %s654 = sand.u32 %s652, 7
        %s655 = smul.addr %s653, 4
        %s656 = scalar_lea.vmem [#allocation3], %s655
        %v657 = vld [vmem:[%s656] sm:$0xf]
        %v658 = vld [vmem:[%s656 + $0x4] sm:$0xf]
        %v659 = vld [vmem:[%s656 + $0x8] sm:$0xf]
        %v660 = vld [vmem:[%s656 + $0xc] sm:$0xf]
        %v661 = vld [vmem:[%s656 + $0x10] sm:$0xf]
        %v662 = vld [vmem:[%s656 + $0x14] sm:$0xf]
        %v663 = vld [vmem:[%s656 + $0x18] sm:$0xf]
        %v664 = vld [vmem:[%s656 + $0x1c] sm:$0xf]
        %v665 = vld [vmem:[%s656 + $0x20] sm:$0xf]
        %v666 = vld [vmem:[%s656 + $0x24] sm:$0xf]
        %v667 = vld [vmem:[%s656 + $0x28] sm:$0xf]
        %v668 = vld [vmem:[%s656 + $0x2c] sm:$0xf]
        %v669 = vld [vmem:[%s656 + $0x30] sm:$0xf]
        %v670 = vld [vmem:[%s656 + $0x34] sm:$0xf]
        %v671 = vld [vmem:[%s656 + $0x38] sm:$0xf]
        %v672 = vld [vmem:[%s656 + $0x3c] sm:$0xf]
        %v673 = vld [vmem:[#allocation2] sm:$0xf]
        %v674 = vld [vmem:[#allocation2 + $0x4] sm:$0xf]
        %v675 = vld [vmem:[#allocation2 + $0x8] sm:$0xf]
        %v676 = vld [vmem:[#allocation2 + $0xc] sm:$0xf]
        %v677 = vld [vmem:[#allocation2 + $0x10] sm:$0xf]
        %v678 = vld [vmem:[#allocation2 + $0x14] sm:$0xf]
        %v679 = vld [vmem:[#allocation2 + $0x18] sm:$0xf]
        %v680 = vld [vmem:[#allocation2 + $0x1c] sm:$0xf]
        %v681 = vld [vmem:[#allocation2 + $0x20] sm:$0xf]
        %v682 = vld [vmem:[#allocation2 + $0x24] sm:$0xf]
        %v683 = vld [vmem:[#allocation2 + $0x28] sm:$0xf]
        %v684 = vld [vmem:[#allocation2 + $0x2c] sm:$0xf]
        %v685 = vld [vmem:[#allocation2 + $0x30] sm:$0xf]
        %v686 = vld [vmem:[#allocation2 + $0x34] sm:$0xf]
        %v687 = vld [vmem:[#allocation2 + $0x38] sm:$0xf]
        %v688 = vld [vmem:[#allocation2 + $0x3c] sm:$0xf]
        %v689 = vld [vmem:[%s344] sm:$0x1]
        %v691 = vperm.slane %v689, 0
        %v709 = vunpack.c.l.b16 %v657
        %v710 = vunpack.c.l.b16 %v658
        %v711 = vunpack.c.l.b16 %v659
        %v712 = vunpack.c.l.b16 %v660
        %v713 = vunpack.c.l.b16 %v661
        %v714 = vunpack.c.l.b16 %v662
        %v715 = vunpack.c.l.b16 %v663
        %v716 = vunpack.c.l.b16 %v664
        %v717 = vunpack.c.l.b16 %v665
        %v718 = vunpack.c.l.b16 %v666
        %v719 = vunpack.c.l.b16 %v667
        %v720 = vunpack.c.l.b16 %v668
        %v721 = vunpack.c.l.b16 %v669
        %v722 = vunpack.c.l.b16 %v670
        %v723 = vunpack.c.l.b16 %v671
        %v724 = vunpack.c.l.b16 %v672
        %v725 = vpack.c.b16 %v710, %v709
        %v726 = vpack.c.b16 %v712, %v711
        %v727 = vpack.c.b16 %v714, %v713
        %v728 = vpack.c.b16 %v716, %v715
        %v729 = vpack.c.b16 %v718, %v717
        %v730 = vpack.c.b16 %v720, %v719
        %v731 = vpack.c.b16 %v722, %v721
        %v732 = vpack.c.b16 %v724, %v723
        %v757 = vunpack.c.l.b16 %v673
        %v758 = vunpack.c.l.b16 %v674
        %v759 = vunpack.c.l.b16 %v675
        %v760 = vunpack.c.l.b16 %v676
        %v761 = vunpack.c.l.b16 %v677
        %v762 = vunpack.c.l.b16 %v678
        %v763 = vunpack.c.l.b16 %v679
        %v764 = vunpack.c.l.b16 %v680
        %v765 = vunpack.c.l.b16 %v681
        %v766 = vunpack.c.l.b16 %v682
        %v767 = vunpack.c.l.b16 %v683
        %v768 = vunpack.c.l.b16 %v684
        %v769 = vunpack.c.l.b16 %v685
        %v770 = vunpack.c.l.b16 %v686
        %v771 = vunpack.c.l.b16 %v687
        %v772 = vunpack.c.l.b16 %v688
        %v773 = vpack.c.b16 %v758, %v757
        %v774 = vpack.c.b16 %v760, %v759
        %v775 = vpack.c.b16 %v762, %v761
        %v776 = vpack.c.b16 %v764, %v763
        %v777 = vpack.c.b16 %v766, %v765
        %v778 = vpack.c.b16 %v768, %v767
        %v779 = vpack.c.b16 %v770, %v769
        %v780 = vpack.c.b16 %v772, %v771
        %789 = vmatpush.bf16.msra.mxu0 %v780
        %790 = vmatpush.bf16.msra.mxu0 %v779
        %791 = vmatpush.bf16.msra.mxu0 %v778
        %792 = vmatpush.bf16.msra.mxu0 %v777
        %793 = vmatpush.bf16.msra.mxu0 %v776
        %794 = vmatpush.bf16.msra.mxu0 %v775
        %795 = vmatpush.bf16.msra.mxu0 %v774
        %796 = vmatpush.bf16.msra.mxu0 %v773
        %797 = vmatmul.bf16.gmra.mxu0 %v725
        %v798 = vpop.f32.mrf.mxu0
        %v799 = vadd.f32 %v691, %v798
        %v800 = vpop.f32.mrf.mxu0
        %v801 = vadd.f32 %v691, %v800
        %802 = vmatmul.bf16.gmra.mxu0 %v726
        %v803 = vpop.f32.mrf.mxu0
        %v804 = vadd.f32 %v691, %v803
        %v805 = vpop.f32.mrf.mxu0
        %v806 = vadd.f32 %v691, %v805
        %807 = vmatmul.bf16.gmra.mxu0 %v727
        %v808 = vpop.f32.mrf.mxu0
        %v809 = vadd.f32 %v691, %v808
        %v810 = vpop.f32.mrf.mxu0
        %v811 = vadd.f32 %v691, %v810
        %812 = vmatmul.bf16.gmra.mxu0 %v728
        %v813 = vpop.f32.mrf.mxu0
        %v814 = vadd.f32 %v691, %v813
        %v815 = vpop.f32.mrf.mxu0
        %v816 = vadd.f32 %v691, %v815
        %817 = vmatmul.bf16.gmra.mxu0 %v729
        %v818 = vpop.f32.mrf.mxu0
        %v819 = vadd.f32 %v691, %v818
        %v820 = vpop.f32.mrf.mxu0
        %v821 = vadd.f32 %v691, %v820
        %822 = vmatmul.bf16.gmra.mxu0 %v730
        %v823 = vpop.f32.mrf.mxu0
        %v824 = vadd.f32 %v691, %v823
        %v825 = vpop.f32.mrf.mxu0
        %v826 = vadd.f32 %v691, %v825
        %827 = vmatmul.bf16.gmra.mxu0 %v731
        %v828 = vpop.f32.mrf.mxu0
        %v829 = vadd.f32 %v691, %v828
        %v830 = vpop.f32.mrf.mxu0
        %v831 = vadd.f32 %v691, %v830
        %832 = vmatmul.bf16.gmra.mxu0 %v732
        %v833 = vpop.f32.mrf.mxu0
        %v834 = vadd.f32 %v691, %v833
        %v835 = vpop.f32.mrf.mxu0
        %v836 = vadd.f32 %v691, %v835
        %837 = vdwg.mxu0
        %vm838 = vcmp.gt.f32.partialorder %v799, 0.0
        %vm839 = vcmp.gt.f32.partialorder %v801, 0.0
        %vm840 = vcmp.gt.f32.partialorder %v804, 0.0
        %vm841 = vcmp.gt.f32.partialorder %v806, 0.0
        %vm842 = vcmp.gt.f32.partialorder %v809, 0.0
        %vm843 = vcmp.gt.f32.partialorder %v811, 0.0
        %vm844 = vcmp.gt.f32.partialorder %v814, 0.0
        %vm845 = vcmp.gt.f32.partialorder %v816, 0.0
        %vm846 = vcmp.gt.f32.partialorder %v819, 0.0
        %vm847 = vcmp.gt.f32.partialorder %v821, 0.0
        %vm848 = vcmp.gt.f32.partialorder %v824, 0.0
        %vm849 = vcmp.gt.f32.partialorder %v826, 0.0
        %vm850 = vcmp.gt.f32.partialorder %v829, 0.0
        %vm851 = vcmp.gt.f32.partialorder %v831, 0.0
        %vm852 = vcmp.gt.f32.partialorder %v834, 0.0
        %vm853 = vcmp.gt.f32.partialorder %v836, 0.0
        %v854 = vmul.f32 %v799, 0.01
        %v855 = vmul.f32 %v801, 0.01
        %v856 = vmul.f32 %v804, 0.01
        %v857 = vmul.f32 %v806, 0.01
        %v858 = vmul.f32 %v809, 0.01
        %v859 = vmul.f32 %v811, 0.01
        %v860 = vmul.f32 %v814, 0.01
        %v861 = vmul.f32 %v816, 0.01
        %v862 = vmul.f32 %v819, 0.01
        %v863 = vmul.f32 %v821, 0.01
        %v864 = vmul.f32 %v824, 0.01
        %v865 = vmul.f32 %v826, 0.01
        %v866 = vmul.f32 %v829, 0.01
        %v867 = vmul.f32 %v831, 0.01
        %v868 = vmul.f32 %v834, 0.01
        %v869 = vmul.f32 %v836, 0.01
        %v870 = vsel %vm838, %v799, %v854
        %v871 = vsel %vm839, %v801, %v855
        %v872 = vsel %vm840, %v804, %v856
        %v873 = vsel %vm841, %v806, %v857
        %v874 = vsel %vm842, %v809, %v858
        %v875 = vsel %vm843, %v811, %v859
        %v876 = vsel %vm844, %v814, %v860
        %v877 = vsel %vm845, %v816, %v861
        %v878 = vsel %vm846, %v819, %v862
        %v879 = vsel %vm847, %v821, %v863
        %v880 = vsel %vm848, %v824, %v864
        %v881 = vsel %vm849, %v826, %v865
        %v882 = vsel %vm850, %v829, %v866
        %v883 = vsel %vm851, %v831, %v867
        %v884 = vsel %vm852, %v834, %v868
        %v885 = vsel %vm853, %v836, %v869
        %v886 = vld [vmem:[%s353] sm:$0x1]
        %v888 = vperm.slane %v886, 0
        %v890 = vmul.f32 %v870, %v888
        %v891 = vmul.f32 %v871, %v888
        %v892 = vmul.f32 %v872, %v888
        %v893 = vmul.f32 %v873, %v888
        %v894 = vmul.f32 %v874, %v888
        %v895 = vmul.f32 %v875, %v888
        %v896 = vmul.f32 %v876, %v888
        %v897 = vmul.f32 %v877, %v888
        %v898 = vmul.f32 %v878, %v888
        %v899 = vmul.f32 %v879, %v888
        %v900 = vmul.f32 %v880, %v888
        %v901 = vmul.f32 %v881, %v888
        %v902 = vmul.f32 %v882, %v888
        %v903 = vmul.f32 %v883, %v888
        %v904 = vmul.f32 %v884, %v888
        %v905 = vmul.f32 %v885, %v888
        %v906 = vld [vmem:[%s362] sm:$0x1]
        %v908 = vperm.slane %v906, 0
        %v910 = vadd.f32 %v890, %v908
        %v911 = vadd.f32 %v891, %v908
        %v912 = vadd.f32 %v892, %v908
        %v913 = vadd.f32 %v893, %v908
        %v914 = vadd.f32 %v894, %v908
        %v915 = vadd.f32 %v895, %v908
        %v916 = vadd.f32 %v896, %v908
        %v917 = vadd.f32 %v897, %v908
        %v918 = vadd.f32 %v898, %v908
        %v919 = vadd.f32 %v899, %v908
        %v920 = vadd.f32 %v900, %v908
        %v921 = vadd.f32 %v901, %v908
        %v922 = vadd.f32 %v902, %v908
        %v923 = vadd.f32 %v903, %v908
        %v924 = vadd.f32 %v904, %v908
        %v925 = vadd.f32 %v905, %v908
        %v926 = vpack.c.bf16 %v910, %v910
        %v927 = vpack.c.bf16 %v911, %v911
        %v928 = vpack.c.bf16 %v912, %v912
        %v929 = vpack.c.bf16 %v913, %v913
        %v930 = vpack.c.bf16 %v914, %v914
        %v931 = vpack.c.bf16 %v915, %v915
        %v932 = vpack.c.bf16 %v916, %v916
        %v933 = vpack.c.bf16 %v917, %v917
        %v934 = vpack.c.bf16 %v918, %v918
        %v935 = vpack.c.bf16 %v919, %v919
        %v936 = vpack.c.bf16 %v920, %v920
        %v937 = vpack.c.bf16 %v921, %v921
        %v938 = vpack.c.bf16 %v922, %v922
        %v939 = vpack.c.bf16 %v923, %v923
        %v940 = vpack.c.bf16 %v924, %v924
        %v941 = vpack.c.bf16 %v925, %v925
        %s942 = smul.addr %s653, 4
        %s943 = scalar_lea.vmem [#allocation12], %s942
        %944 = vst [vmem:[%s943] sm:$0xf] %v926
        %945 = vst [vmem:[%s943 + $0x4] sm:$0xf] %v927
        %946 = vst [vmem:[%s943 + $0x8] sm:$0xf] %v928
        %947 = vst [vmem:[%s943 + $0xc] sm:$0xf] %v929
        %948 = vst [vmem:[%s943 + $0x10] sm:$0xf] %v930
        %949 = vst [vmem:[%s943 + $0x14] sm:$0xf] %v931
        %950 = vst [vmem:[%s943 + $0x18] sm:$0xf] %v932
        %951 = vst [vmem:[%s943 + $0x1c] sm:$0xf] %v933
        %952 = vst [vmem:[%s943 + $0x20] sm:$0xf] %v934
        %953 = vst [vmem:[%s943 + $0x24] sm:$0xf] %v935
        %954 = vst [vmem:[%s943 + $0x28] sm:$0xf] %v936
        %955 = vst [vmem:[%s943 + $0x2c] sm:$0xf] %v937
        %956 = vst [vmem:[%s943 + $0x30] sm:$0xf] %v938
        %957 = vst [vmem:[%s943 + $0x34] sm:$0xf] %v939
        %958 = vst [vmem:[%s943 + $0x38] sm:$0xf] %v940
        %959 = vst [vmem:[%s943 + $0x3c] sm:$0xf] %v941
        // Predicated region
        $region81: #{tpu_custom_call.1} parent=43 // pred_check
          %p960 = pneg %p191
        $region82: #{tpu_custom_call.1} parent=43 // pred_check_branch
          %962 = sbr.rel (%p960) target = $region84
        $region83: #{tpu_custom_call.1} parent=43 // pred_region
          %964 = vsyncadd [#allocation5], 0
          %s965 = sshll.u32 [#allocation12], 4
          %s966 = int_to_ptr.vmem [resolvable:$true] %s965
          %s967 = sshll.u32 %s6, 4
          %s968 = int_to_ptr.hbm [resolvable:$true] %s967
          %973 = dma.vmem_to_hbm [thread:$0]  %s966, 1024, %s968, [#allocation5], 64, 64, 4
        $region84: #{tpu_custom_call.1} parent=43 // pred_fallthru
          _
        // Predicated region
        $region85: #{tpu_custom_call.1} parent=43 // pred_check
          %p974 = pneg %p191
        $region86: #{tpu_custom_call.1} parent=43 // pred_check_branch
          %976 = sbr.rel (%p974) target = $region88
        $region87: #{tpu_custom_call.1} parent=43 // pred_region
          %978 = dma.done [#allocation5], 1024
        $region88: #{tpu_custom_call.1} parent=43 // pred_fallthru
          _
      $region44: #{tpu_custom_call.1} parent=5 // pred_fallthru
        _
      %p979 = scmp.le.s32.totalorder 2, %s15
      // Predicated region
      $region89: #{tpu_custom_call.1} parent=5 // pred_check
        %p980 = pneg %p979
      $region90: #{tpu_custom_call.1} parent=5 // pred_check_branch
        %982 = sbr.rel (%p980) target = $region92
      $region91: #{tpu_custom_call.1} parent=5 // pred_region
        %s983 = ssub.s32 %s15, 2
      $region92: #{tpu_custom_call.1} parent=5 // pred_fallthru
        _
    $region6: #{tpu_custom_call.1} parent=1 // loop_footer
      %s19 = sadd.s32 1, %s15
    $region7: #{tpu_custom_call.1} parent=1 // loop_footer_branch
      %14 = sbr.rel target = $region3
    $region8: #{tpu_custom_call.1} parent=1 // loop_exit
      _
    %984 = vsyncpa [#allocation4], 1
    %s985 = scalar_lea.sflag [#allocation4], 1
    %986 = vsyncpa %s985, 1
    %987 = vsyncpa [#allocation7], 1
    %988 = vsyncpa [#allocation5], 1
    %s989 = scalar_lea.sflag [#allocation5], 1
    %990 = vsyncpa %s989, 1

</llo_original>
